<compile_context>
chip_gen: v6e
topology: v6e:2x2x1
jax: 0.10.0
libtpu: 0.0.40
codegen_flags: <defaults>
</compile_context>

<pallas_src>
import functools

import jax
import jax.numpy as jnp
from jax import lax
from jax.experimental import pallas as pl
from jax.experimental.pallas import tpu as pltpu


def make_dft_weights(P):
    """Rows 0..P-1 = Re(F), rows P..2P-1 = Im(F), with F[k,p] = exp(-2*pi*i*k*p/P)."""
    k = jnp.arange(P, dtype=jnp.float32)[:, None]
    p = jnp.arange(P, dtype=jnp.float32)[None, :]
    ang = 2.0 * jnp.pi * k * p / float(P)
    return jnp.concatenate([jnp.cos(ang), -jnp.sin(ang)], axis=0).astype(jnp.float32)


def _round_up(x, m):
    return ((x + m - 1) // m) * m


def _fused_fir_dft(w, xfull, M, T_len):
    """One fused FIR+DFT matmul.

    w     : (2P, M*P) combined weights C[k, m*P+p] = DFT[k,p] * win[m*P+p]
    xfull : (>= T_len + M - 1, P) time-major samples, P on lanes
    returns (2P, T_len) float32
    """
    # im2col: M sublane-shifted views concatenated along lanes -> (T_len, M*P).
    xs = jnp.concatenate([xfull[m:m + T_len, :] for m in range(M)], axis=1)
    # dot_general contracting the last dims of both operands (A @ B^T pattern),
    # result lands directly in the (2P, T_len) store orientation.
    return lax.dot_general(
        w, xs,
        dimension_numbers=(((1,), (1,)), ((), ())),
        preferred_element_type=jnp.float32)


def _pfb_kernel_small(x_ref, w_ref, o_ref, *, M, T_len, bt):
    """Tiny-problem path: whole time axis per block, `bt` batch rows per grid step.

    x_ref : (bt, WM, P)
    w_ref : (2P, M*P)
    o_ref : (bt, 2P, T_len)
    """
    w = w_ref[...]
    for b in range(bt):                      # static unroll, bt is small
        out = _fused_fir_dft(w, x_ref[b], M, T_len)
        o_ref[b] = out.astype(o_ref.dtype)


def _pfb_kernel_tiled(x_ref, halo_ref, w_ref, o_ref, *, M, T_len):
    """Tiled path: one (batch, time-tile) grid step.

    x_ref    : (1, T_len, P)  current time tile
    halo_ref : (1, h_blk, P)  next few samples of the same batch row (FIR halo)
    w_ref    : (2P, M*P)      combined FIR+DFT weights
    o_ref    : (1, 2P, T_len) output tile (time on lanes -> lane-dense store)
    """
    xfull = jnp.concatenate([x_ref[0], halo_ref[0]], axis=0)   # (T_len + h_blk, P)
    out = _fused_fir_dft(w_ref[...], xfull, M, T_len)
    o_ref[0] = out.astype(o_ref.dtype)


def pfb_fir_dft(x, win_coeffs, M, P, expected_input_size):
    """x: (B, expected_input_size) float32, win_coeffs: (M*P,) float32.

    Returns (B, 2P, 1, Maxsize) float32, matching the PyTorch module.
    """
    B = x.shape[0]
    assert expected_input_size % (M * P) == 0, "expected_input_size must equal M*P*W"
    W = expected_input_size // (M * P)
    WM = M * W
    Maxsize = WM - M
    assert Maxsize > 0, "need W >= 2 windows"

    # Natural layout: (B, WM, P) is a *free* view of the flat input (P on lanes).
    xr = x.reshape(B, WM, P).astype(jnp.float32)

    # Fold the depthwise FIR into the DFT: C[k, m*P + p] = DFT[k, p] * win[m*P + p].
    wmp = win_coeffs.reshape(M, P).astype(jnp.float32)        # wmp[m, p] = tap m, chan p
    dft_w = make_dft_weights(P)                               # (2P, P)
    comb_w = (dft_w[:, None, :] * wmp[None, :, :]).reshape(2 * P, M * P)

    budget = 20 << 20  # per-step VMEM working-set budget (bytes)

    if Maxsize <= 128:
        # Tiny problem: exact-fit single time block, no halo, batch rows grouped.
        T_len = Maxsize

        def small_est(bt_):
            return 4 * (2 * bt_ * WM * P               # double-buffered input
                        + 2 * bt_ * 2 * P * T_len      # double-buffered output
                        + 2 * P * M * P                # fused weights
                        + bt_ * 2 * T_len * M * P)     # im2col intermediates (slack)

        bt = max(1, min(B, 8))
        while bt > 1 and small_est(bt) > budget:
            bt //= 2
        nB = pl.cdiv(B, bt)

        vmem_limit = int(min(max(small_est(bt) + (8 << 20), 32 << 20), 48 << 20))
        kernel = functools.partial(_pfb_kernel_small, M=M, T_len=T_len, bt=bt)

        out = pl.pallas_call(
            kernel,
            out_shape=jax.ShapeDtypeStruct((B, 2 * P, Maxsize), jnp.float32),
            grid=(nB,),
            in_specs=[
                pl.BlockSpec((bt, WM, P), lambda i: (i, 0, 0)),        # bt batch rows
                pl.BlockSpec((2 * P, M * P), lambda i: (0, 0)),        # fused weights
            ],
            out_specs=pl.BlockSpec((bt, 2 * P, Maxsize), lambda i: (i, 0, 0)),
            compiler_params=pltpu.CompilerParams(
                dimension_semantics=("parallel",),
                vmem_limit_bytes=vmem_limit,
            ),
        )(xr, comb_w)
        return out.reshape(B, 2 * P, 1, Maxsize)

    # --- Tiled path: lane-dense time tiles (multiple of 128) + small FIR halo. ---
    halo = 8
    while halo < M - 1:
        halo *= 2

    t = max(128, min(1024, _round_up(Maxsize, 128)))
    t = _round_up(t, halo)
    step = max(128, halo)
    while t > step:
        est = 4 * (2 * (t + halo) * P      # double-buffered input + halo
                   + 4 * P * t             # double-buffered output (2P x t)
                   + 2 * P * M * P         # fused weights
                   + 2 * t * M * P)        # im2col intermediate (with slack)
        if est <= budget:
            break
        t -= step
    T_len = t
    h_blk = halo
    n_halo_blocks = pl.cdiv(WM, h_blk)
    step_blocks = T_len // h_blk

    # Halo = first h_blk rows after the current tile, clamped at the array end;
    # clamped/garbage halo rows only affect output columns >= Maxsize, which are
    # masked on writeback.
    halo_index_map = lambda b, j: (
        b, jnp.minimum((j + 1) * step_blocks, n_halo_blocks - 1), 0)

    nT = pl.cdiv(Maxsize, T_len)

    est_vmem = 4 * (2 * (T_len + h_blk) * P + 4 * P * T_len
                    + 2 * P * M * P + 2 * T_len * M * P)
    vmem_limit = int(min(max(est_vmem + (8 << 20), 32 << 20), 48 << 20))

    kernel = functools.partial(_pfb_kernel_tiled, M=M, T_len=T_len)

    out = pl.pallas_call(
        kernel,
        out_shape=jax.ShapeDtypeStruct((B, 2 * P, Maxsize), jnp.float32),
        grid=(B, nT),
        in_specs=[
            pl.BlockSpec((1, T_len, P), lambda b, j: (b, j, 0)),      # current tile
            pl.BlockSpec((1, h_blk, P), halo_index_map),              # FIR halo
            pl.BlockSpec((2 * P, M * P), lambda b, j: (0, 0)),        # fused weights
        ],
        out_specs=pl.BlockSpec((1, 2 * P, T_len), lambda b, j: (b, 0, j)),
        compiler_params=pltpu.CompilerParams(
            dimension_semantics=("parallel", "parallel"),
            vmem_limit_bytes=vmem_limit,
        ),
    )(xr, xr, comb_w)

    # Free view back to PyTorch NCHW (B, 2P, 1, Maxsize).
    return out.reshape(B, 2 * P, 1, Maxsize)


def pfb_fir_dft_reference(x, win_coeffs, M, P, expected_input_size):
    """Pure-JAX reference mirroring the PyTorch ops step by step."""
    B = x.shape[0]
    W = expected_input_size // (M * P)
    WM = M * W
    Maxsize = WM - M
    xr = x.reshape(B, WM, P).transpose(0, 2, 1)[:, :, : WM - 1].astype(jnp.float32)
    fir_w = win_coeffs.reshape(M, P).T.astype(jnp.float32)           # (P, M)
    dft_w = make_dft_weights(P)                                      # (2P, P)
    y = jnp.zeros((B, P, Maxsize), jnp.float32)
    for m in range(M):
        y = y + xr[:, :, m:m + Maxsize] * fir_w[None, :, m:m + 1]
    out = jnp.einsum("kp,bpt->bkt", dft_w, y)
    return out.reshape(B, 2 * P, 1, Maxsize)


if __name__ == "__main__":
    key = jax.random.PRNGKey(0)
    k1, k2, k3, k4 = jax.random.split(key, 4)

    # Test 1: tiny shapes -> exact-fit, batched single-block path.
    B, M, P, W = 2, 4, 8, 4
    expected_input_size = M * P * W  # 128
    x = jax.random.normal(k1, (B, expected_input_size), dtype=jnp.float32)
    win_coeffs = jax.random.normal(k2, (M * P,), dtype=jnp.float32)

    out = jax.block_until_ready(pfb_fir_dft(x, win_coeffs, M, P, expected_input_size))
    ref = pfb_fir_dft_reference(x, win_coeffs, M, P, expected_input_size)
    assert out.shape == (B, 2 * P, 1, (M * W) - M), out.shape
    assert jnp.allclose(out, ref, atol=1e-3, rtol=1e-3), "mismatch vs reference (small)"

    # Test 2: moderate shape -> exercises the lane-dense tiled path
    # (multiple 1024-wide time tiles, clamped FIR halo, masked tail writes).
    B2, M2, P2, W2 = 2, 4, 16, 300
    size2 = M2 * P2 * W2  # 19200
    x2 = jax.random.normal(k3, (B2, size2), dtype=jnp.float32)
    win2 = jax.random.normal(k4, (M2 * P2,), dtype=jnp.float32)

    out2 = jax.block_until_ready(pfb_fir_dft(x2, win2, M2, P2, size2))
    ref2 = pfb_fir_dft_reference(x2, win2, M2, P2, size2)
    assert out2.shape == (B2, 2 * P2, 1, (M2 * W2) - M2), out2.shape
    assert jnp.allclose(out2, ref2, atol=2e-3, rtol=2e-3), "mismatch vs reference (tiled)"

    print("KERNEL_OK")
</pallas_src>

<mosaic_0001>
module attributes {stable_mosaic.version = 11 : i64} {
  func.func @_pfb_kernel_small(%arg0: i32, %arg1: memref<2x16x8xf32, #tpu.memory_space<vmem>>, %arg2: memref<16x32xf32, #tpu.memory_space<vmem>>, %arg3: memref<2x16x12xf32, #tpu.memory_space<vmem>>) attributes {dimension_semantics = [#tpu.dimension_semantics<parallel>], iteration_bounds = array<i64: 1>, scalar_prefetch = 0 : i64, scratch_operands = 0 : i64, tpu.core_type = #tpu.core_type<tc>, window_params = [{transform_indices = @transform_0, window_bounds = array<i64: 2, 16, 8>}, {pipeline_mode = #tpu.pipeline_mode<synchronous>, transform_indices = @transform_1, window_bounds = array<i64: 16, 32>}, {transform_indices = @transform_2, window_bounds = array<i64: 2, 16, 12>}]} {
    %c0 = arith.constant 0 : index
    %c0_0 = arith.constant 0 : index
    %0 = vector.load %arg2[%c0, %c0_0] : memref<16x32xf32, #tpu.memory_space<vmem>>, vector<16x32xf32>
    %c0_1 = arith.constant 0 : index
    %c0_2 = arith.constant 0 : index
    %c0_3 = arith.constant 0 : index
    %1 = vector.load %arg1[%c0_1, %c0_2, %c0_3] : memref<2x16x8xf32, #tpu.memory_space<vmem>>, vector<1x16x8xf32>
    %2 = vector.shape_cast %1 : vector<1x16x8xf32> to vector<16x8xf32>
    %3 = vector.extract_strided_slice %2 {offsets = [0, 0], sizes = [12, 8], strides = [1, 1]} : vector<16x8xf32> to vector<12x8xf32>
    %4 = vector.extract_strided_slice %2 {offsets = [1, 0], sizes = [12, 8], strides = [1, 1]} : vector<16x8xf32> to vector<12x8xf32>
    %5 = vector.extract_strided_slice %2 {offsets = [2, 0], sizes = [12, 8], strides = [1, 1]} : vector<16x8xf32> to vector<12x8xf32>
    %6 = vector.extract_strided_slice %2 {offsets = [3, 0], sizes = [12, 8], strides = [1, 1]} : vector<16x8xf32> to vector<12x8xf32>
    %7 = tpu.concatenate %3, %4, %5, %6 in 1 : vector<12x8xf32>, vector<12x8xf32>, vector<12x8xf32>, vector<12x8xf32> -> vector<12x32xf32>
    %cst = arith.constant dense<0.000000e+00> : vector<16x12xf32>
    %8 = tpu.matmul %0, %7, %cst {dimension_numbers = #tpu.dot_dimension_numbers<[1], [1], [0], [0], [0, 0, 1, 0], [], []>} : vector<16x32xf32>, vector<12x32xf32>, vector<16x12xf32> -> vector<16x12xf32>
    %c0_4 = arith.constant 0 : index
    %c0_5 = arith.constant 0 : index
    %c0_6 = arith.constant 0 : index
    %9 = vector.load %arg3[%c0_4, %c0_5, %c0_6] : memref<2x16x12xf32, #tpu.memory_space<vmem>>, vector<1x16x12xf32>
    %10 = vector.shape_cast %9 : vector<1x16x12xf32> to vector<16x12xf32>
    %11 = vector.shape_cast %8 : vector<16x12xf32> to vector<1x16x12xf32>
    tpu.vector_store %arg3[%c0_4, %c0_5, %c0_6], %11 {strides = array<i32>} : memref<2x16x12xf32, #tpu.memory_space<vmem>>, vector<1x16x12xf32>,
    %c1 = arith.constant 1 : index
    %c0_7 = arith.constant 0 : index
    %c0_8 = arith.constant 0 : index
    %12 = vector.load %arg1[%c1, %c0_7, %c0_8] : memref<2x16x8xf32, #tpu.memory_space<vmem>>, vector<1x16x8xf32>
    %13 = vector.shape_cast %12 : vector<1x16x8xf32> to vector<16x8xf32>
    %14 = vector.extract_strided_slice %13 {offsets = [0, 0], sizes = [12, 8], strides = [1, 1]} : vector<16x8xf32> to vector<12x8xf32>
    %15 = vector.extract_strided_slice %13 {offsets = [1, 0], sizes = [12, 8], strides = [1, 1]} : vector<16x8xf32> to vector<12x8xf32>
    %16 = vector.extract_strided_slice %13 {offsets = [2, 0], sizes = [12, 8], strides = [1, 1]} : vector<16x8xf32> to vector<12x8xf32>
    %17 = vector.extract_strided_slice %13 {offsets = [3, 0], sizes = [12, 8], strides = [1, 1]} : vector<16x8xf32> to vector<12x8xf32>
    %18 = tpu.concatenate %14, %15, %16, %17 in 1 : vector<12x8xf32>, vector<12x8xf32>, vector<12x8xf32>, vector<12x8xf32> -> vector<12x32xf32>
    %cst_9 = arith.constant dense<0.000000e+00> : vector<16x12xf32>
    %19 = tpu.matmul %0, %18, %cst_9 {dimension_numbers = #tpu.dot_dimension_numbers<[1], [1], [0], [0], [0, 0, 1, 0], [], []>} : vector<16x32xf32>, vector<12x32xf32>, vector<16x12xf32> -> vector<16x12xf32>
    %c1_10 = arith.constant 1 : index
    %c0_11 = arith.constant 0 : index
    %c0_12 = arith.constant 0 : index
    %20 = vector.load %arg3[%c1_10, %c0_11, %c0_12] : memref<2x16x12xf32, #tpu.memory_space<vmem>>, vector<1x16x12xf32>
    %21 = vector.shape_cast %20 : vector<1x16x12xf32> to vector<16x12xf32>
    %22 = vector.shape_cast %19 : vector<16x12xf32> to vector<1x16x12xf32>
    tpu.vector_store %arg3[%c1_10, %c0_11, %c0_12], %22 {strides = array<i32>} : memref<2x16x12xf32, #tpu.memory_space<vmem>>, vector<1x16x12xf32>,
    return
  }
  func.func @transform_0(%arg0: i32) -> (i32, i32, i32) {
    %c0_i32 = arith.constant 0 : i32
    %c0_i32_0 = arith.constant 0 : i32
    %c0_i32_1 = arith.constant 0 : i32
    return %arg0, %c0_i32, %c0_i32_0 : i32, i32, i32
  }
  func.func @transform_1(%arg0: i32) -> (i32, i32) {
    %c0_i32 = arith.constant 0 : i32
    %c0_i32_0 = arith.constant 0 : i32
    %c0_i32_1 = arith.constant 0 : i32
    return %c0_i32, %c0_i32_0 : i32, i32
  }
  func.func @transform_2(%arg0: i32) -> (i32, i32, i32) {
    %c0_i32 = arith.constant 0 : i32
    %c0_i32_0 = arith.constant 0 : i32
    %c0_i32_1 = arith.constant 0 : i32
    return %arg0, %c0_i32, %c0_i32_0 : i32, i32, i32
  }
}

</mosaic_0001>

<llo_original>
// kernel: tpu_custom_call.1
$region0: #{tpu_custom_call.1}
  #allocation0 [shape = 'u32[]', space=smem, size = 0x4, offset = 0x4, fixed_abs, tag = 'smem constant byte address 0x4 - core index']
  #allocation1 [shape = 'u32[144,128]{1,0:T(1,128)}', space=vmem, size = 0x12000, scoped, tag = 'internal scratch']
  %s0 = inlined_call_operand.vmem [shape: f32[2,16,8], index: 0, kind: input, shape index: {}]
  %s1 = inlined_call_operand.vmem [shape: f32[16,32], index: 1, kind: input, shape index: {}]
  %s2 = inlined_call_operand.vmem [shape: f32[2,16,12], index: 2, kind: output, shape index: {}]
  %s3 = sld [smem:[#allocation0]]
  $region18: #{tpu_custom_call.1} parent=0
    _
  %s5 = ssub.s32 1, %s3
  %s6 = scalar_select 0, %s5, %s3
  // Predicated region
  $region2: #{tpu_custom_call.1} parent=0 // pred_check
    _
  $region3: #{tpu_custom_call.1} parent=0 // pred_check_branch
    %8 = sbr.rel (0) target = $region5
  $region4: #{tpu_custom_call.1} parent=0 // pred_region
    _
  $region5: #{tpu_custom_call.1} parent=0 // pred_fallthru
    _
  // Predicated region
  $region6: #{tpu_custom_call.1} parent=0 // pred_check
    _
  $region7: #{tpu_custom_call.1} parent=0 // pred_check_branch
    %10 = sbr.rel (0) target = $region9
  $region8: #{tpu_custom_call.1} parent=0 // pred_region
    _
  $region9: #{tpu_custom_call.1} parent=0 // pred_fallthru
    _
  %v11 = vld [vmem:[%s1] sm:$0xff]
  %v12 = vld [vmem:[%s1 + $0x8] sm:$0xff]
  %v13 = vld [vmem:[%s0] sm:$0xff]
  %v14 = vld [vmem:[%s0 + $0x8] sm:$0xff]
  %vm17 = vcmask 1046528
  %v18 = vrot.slane %v13, 1
  %v19 = vrot.slane %v14, 1
  %v20 = vsel %vm17, %v18, %v19
  %21 = vrot.lane.b32.xlu0 %v20, 8
  %v22 = vpop.permute.xlu0 %21
  %23 = vrot.lane.b32.xlu0 %v19, 8
  %v24 = vpop.permute.xlu0 %23
  %vm27 = vcmask 1045504
  %v28 = vrot.slane %v13, 2
  %v29 = vrot.slane %v14, 2
  %v30 = vsel %vm27, %v28, %v29
  %31 = vrot.lane.b32.xlu0 %v30, 16
  %v32 = vpop.permute.xlu0 %31
  %33 = vrot.lane.b32.xlu0 %v29, 16
  %v34 = vpop.permute.xlu0 %33
  %vm37 = vcmask 1044480
  %v38 = vrot.slane %v13, 3
  %v39 = vrot.slane %v14, 3
  %v40 = vsel %vm37, %v38, %v39
  %41 = vrot.lane.b32.xlu0 %v40, 24
  %v42 = vpop.permute.xlu0 %41
  %43 = vrot.lane.b32.xlu0 %v39, 24
  %v44 = vpop.permute.xlu0 %43
  %vm47 = vcmask 64512
  %v48 = vsel %vm47, %v13, %v22
  %v49 = vsel %vm47, %v14, %v24
  %vm50 = vcmask 130048
  %v51 = vsel %vm50, %v48, %v32
  %v52 = vsel %vm50, %v49, %v34
  %vm53 = vcmask 195584
  %v54 = vsel %vm53, %v51, %v42
  %v55 = vsel %vm53, %v52, %v44
  %vm56 = vcmask 261120
  %v58 = vsel %vm56, %v11, 0
  %v61 = vsel %vm56, %v12, 0
  %v64 = vsel %vm56, %v54, 0
  %v67 = vsel %vm56, %v55, 0
  %69 = vmatprep.subr.mxu0 0.0
  %70 = vmatpush1.xpose.msra.mxu0 0.0
  %71 = vmatprep.subr.mxu0 0.0
  %72 = vmatpush1.xpose.msra.mxu0 0.0
  %73 = vmatprep.subr.mxu0 0.0
  %74 = vmatpush1.xpose.msra.mxu0 0.0
  %75 = vmatprep.subr.mxu0 0.0
  %76 = vmatpush1.xpose.msra.mxu0 0.0
  %77 = vmatprep.subr.mxu0 0.0
  %78 = vmatpush1.xpose.msra.mxu0 0.0
  %79 = vmatprep.subr.mxu0 0.0
  %80 = vmatpush1.xpose.msra.mxu0 0.0
  %81 = vmatprep.subr.mxu0 0.0
  %82 = vmatpush1.xpose.msra.mxu0 0.0
  %83 = vmatprep.subr.mxu0 0.0
  %84 = vmatpush1.xpose.msra.mxu0 0.0
  %85 = vmatprep.subr.mxu0 0.0
  %86 = vmatpush1.xpose.msra.mxu0 0.0
  %87 = vmatprep.subr.mxu0 0.0
  %88 = vmatpush1.xpose.msra.mxu0 0.0
  %89 = vmatprep.subr.mxu0 0.0
  %90 = vmatpush1.xpose.msra.mxu0 0.0
  %91 = vmatprep.subr.mxu0 0.0
  %92 = vmatpush1.xpose.msra.mxu0 0.0
  %93 = vmatprep.subr.mxu0 0.0
  %94 = vmatpush1.xpose.msra.mxu0 0.0
  %95 = vmatprep.subr.mxu0 0.0
  %96 = vmatpush1.xpose.msra.mxu0 0.0
  %97 = vmatprep.subr.mxu0 0.0
  %98 = vmatpush1.xpose.msra.mxu0 %v67
  %99 = vmatprep.subr.mxu0 0.0
  %100 = vmatpush1.xpose.msra.mxu0 %v64
  %101 = vmatprep.subr.mxu0 0.0
  %102 = vmatpush2.xpose.msra.mxu0 0.0
  %103 = vmatprep.subr.mxu0 0.0
  %104 = vmatpush2.xpose.msra.mxu0 0.0
  %105 = vmatprep.subr.mxu0 0.0
  %106 = vmatpush2.xpose.msra.mxu0 0.0
  %107 = vmatprep.subr.mxu0 0.0
  %108 = vmatpush2.xpose.msra.mxu0 0.0
  %109 = vmatprep.subr.mxu0 0.0
  %110 = vmatpush2.xpose.msra.mxu0 0.0
  %111 = vmatprep.subr.mxu0 0.0
  %112 = vmatpush2.xpose.msra.mxu0 0.0
  %113 = vmatprep.subr.mxu0 0.0
  %114 = vmatpush2.xpose.msra.mxu0 0.0
  %115 = vmatprep.subr.mxu0 0.0
  %116 = vmatpush2.xpose.msra.mxu0 0.0
  %117 = vmatprep.subr.mxu0 0.0
  %118 = vmatpush2.xpose.msra.mxu0 0.0
  %119 = vmatprep.subr.mxu0 0.0
  %120 = vmatpush2.xpose.msra.mxu0 0.0
  %121 = vmatprep.subr.mxu0 0.0
  %122 = vmatpush2.xpose.msra.mxu0 0.0
  %123 = vmatprep.subr.mxu0 0.0
  %124 = vmatpush2.xpose.msra.mxu0 0.0
  %125 = vmatprep.subr.mxu0 0.0
  %126 = vmatpush2.xpose.msra.mxu0 0.0
  %127 = vmatprep.subr.mxu0 0.0
  %128 = vmatpush2.xpose.msra.mxu0 0.0
  %129 = vmatprep.subr.mxu0 0.0
  %130 = vmatpush2.xpose.msra.mxu0 0.0
  %131 = vmatprep.subr.mxu0 0.0
  %132 = vmatpush2.xpose.msra.mxu0 0.0
  %133 = vmatprep.mubr.f32.mxu0 0.0
  %134 = vmatmul.mubr.f32.gmra.mxu0 %v58
  %v135 = vpop.f32.mrf.mxu0
  %v136 = vadd.f32 0.0, %v135
  %v137 = vpop.f32.mrf.mxu0
  %138 = vmatprep.mubr.f32.mxu0 0.0
  %139 = vmatmul.mubr.f32.gmra.mxu0 %v61
  %v140 = vpop.f32.mrf.mxu0
  %v141 = vadd.f32 0.0, %v140
  %v142 = vpop.f32.mrf.mxu0
  %143 = vdwg.mxu0
  %vm144 = vcmask 97280
  %145 = vst.msk [vmem:[%s2] sm:$0xff] %vm144, %v136
  %146 = vst.msk [vmem:[%s2 + $0x8] sm:$0xff] %vm144, %v141
  %s147 = scalar_lea.vmem %s0, 16
  %v148 = vld [vmem:[%s147] sm:$0xff]
  %v149 = vld [vmem:[%s147 + $0x8] sm:$0xff]
  %v152 = vrot.slane %v148, 1
  %v153 = vrot.slane %v149, 1
  %v154 = vsel %vm17, %v152, %v153
  %155 = vrot.lane.b32.xlu0 %v154, 8
  %v156 = vpop.permute.xlu0 %155
  %157 = vrot.lane.b32.xlu0 %v153, 8
  %v158 = vpop.permute.xlu0 %157
  %v161 = vrot.slane %v148, 2
  %v162 = vrot.slane %v149, 2
  %v163 = vsel %vm27, %v161, %v162
  %164 = vrot.lane.b32.xlu0 %v163, 16
  %v165 = vpop.permute.xlu0 %164
  %166 = vrot.lane.b32.xlu0 %v162, 16
  %v167 = vpop.permute.xlu0 %166
  %v170 = vrot.slane %v148, 3
  %v171 = vrot.slane %v149, 3
  %v172 = vsel %vm37, %v170, %v171
  %173 = vrot.lane.b32.xlu0 %v172, 24
  %v174 = vpop.permute.xlu0 %173
  %175 = vrot.lane.b32.xlu0 %v171, 24
  %v176 = vpop.permute.xlu0 %175
  %v179 = vsel %vm47, %v148, %v156
  %v180 = vsel %vm47, %v149, %v158
  %v181 = vsel %vm50, %v179, %v165
  %v182 = vsel %vm50, %v180, %v167
  %v183 = vsel %vm53, %v181, %v174
  %v184 = vsel %vm53, %v182, %v176
  %v186 = vsel %vm56, %v183, 0
  %v189 = vsel %vm56, %v184, 0
  %191 = vmatprep.subr.mxu0 0.0
  %192 = vmatpush1.xpose.msra.mxu0 0.0
  %193 = vmatprep.subr.mxu0 0.0
  %194 = vmatpush1.xpose.msra.mxu0 0.0
  %195 = vmatprep.subr.mxu0 0.0
  %196 = vmatpush1.xpose.msra.mxu0 0.0
  %197 = vmatprep.subr.mxu0 0.0
  %198 = vmatpush1.xpose.msra.mxu0 0.0
  %199 = vmatprep.subr.mxu0 0.0
  %200 = vmatpush1.xpose.msra.mxu0 0.0
  %201 = vmatprep.subr.mxu0 0.0
  %202 = vmatpush1.xpose.msra.mxu0 0.0
  %203 = vmatprep.subr.mxu0 0.0
  %204 = vmatpush1.xpose.msra.mxu0 0.0
  %205 = vmatprep.subr.mxu0 0.0
  %206 = vmatpush1.xpose.msra.mxu0 0.0
  %207 = vmatprep.subr.mxu0 0.0
  %208 = vmatpush1.xpose.msra.mxu0 0.0
  %209 = vmatprep.subr.mxu0 0.0
  %210 = vmatpush1.xpose.msra.mxu0 0.0
  %211 = vmatprep.subr.mxu0 0.0
  %212 = vmatpush1.xpose.msra.mxu0 0.0
  %213 = vmatprep.subr.mxu0 0.0
  %214 = vmatpush1.xpose.msra.mxu0 0.0
  %215 = vmatprep.subr.mxu0 0.0
  %216 = vmatpush1.xpose.msra.mxu0 0.0
  %217 = vmatprep.subr.mxu0 0.0
  %218 = vmatpush1.xpose.msra.mxu0 0.0
  %219 = vmatprep.subr.mxu0 0.0
  %220 = vmatpush1.xpose.msra.mxu0 %v189
  %221 = vmatprep.subr.mxu0 0.0
  %222 = vmatpush1.xpose.msra.mxu0 %v186
  %223 = vmatprep.subr.mxu0 0.0
  %224 = vmatpush2.xpose.msra.mxu0 0.0
  %225 = vmatprep.subr.mxu0 0.0
  %226 = vmatpush2.xpose.msra.mxu0 0.0
  %227 = vmatprep.subr.mxu0 0.0
  %228 = vmatpush2.xpose.msra.mxu0 0.0
  %229 = vmatprep.subr.mxu0 0.0
  %230 = vmatpush2.xpose.msra.mxu0 0.0
  %231 = vmatprep.subr.mxu0 0.0
  %232 = vmatpush2.xpose.msra.mxu0 0.0
  %233 = vmatprep.subr.mxu0 0.0
  %234 = vmatpush2.xpose.msra.mxu0 0.0
  %235 = vmatprep.subr.mxu0 0.0
  %236 = vmatpush2.xpose.msra.mxu0 0.0
  %237 = vmatprep.subr.mxu0 0.0
  %238 = vmatpush2.xpose.msra.mxu0 0.0
  %239 = vmatprep.subr.mxu0 0.0
  %240 = vmatpush2.xpose.msra.mxu0 0.0
  %241 = vmatprep.subr.mxu0 0.0
  %242 = vmatpush2.xpose.msra.mxu0 0.0
  %243 = vmatprep.subr.mxu0 0.0
  %244 = vmatpush2.xpose.msra.mxu0 0.0
  %245 = vmatprep.subr.mxu0 0.0
  %246 = vmatpush2.xpose.msra.mxu0 0.0
  %247 = vmatprep.subr.mxu0 0.0
  %248 = vmatpush2.xpose.msra.mxu0 0.0
  %249 = vmatprep.subr.mxu0 0.0
  %250 = vmatpush2.xpose.msra.mxu0 0.0
  %251 = vmatprep.subr.mxu0 0.0
  %252 = vmatpush2.xpose.msra.mxu0 0.0
  %253 = vmatprep.subr.mxu0 0.0
  %254 = vmatpush2.xpose.msra.mxu0 0.0
  %255 = vmatprep.mubr.f32.mxu0 0.0
  %256 = vmatmul.mubr.f32.gmra.mxu0 %v58
  %v257 = vpop.f32.mrf.mxu0
  %v258 = vadd.f32 0.0, %v257
  %v259 = vpop.f32.mrf.mxu0
  %260 = vmatprep.mubr.f32.mxu0 0.0
  %261 = vmatmul.mubr.f32.gmra.mxu0 %v61
  %v262 = vpop.f32.mrf.mxu0
  %v263 = vadd.f32 0.0, %v262
  %v264 = vpop.f32.mrf.mxu0
  %265 = vdwg.mxu0
  %s266 = scalar_lea.vmem %s2, 16
  %267 = vst.msk [vmem:[%s266] sm:$0xff] %vm144, %v258
  %268 = vst.msk [vmem:[%s266 + $0x8] sm:$0xff] %vm144, %v263
  // Predicated region
  $region10: #{tpu_custom_call.1} parent=0 // pred_check
    _
  $region11: #{tpu_custom_call.1} parent=0 // pred_check_branch
    %270 = sbr.rel (0) target = $region13
  $region12: #{tpu_custom_call.1} parent=0 // pred_region
    _
  $region13: #{tpu_custom_call.1} parent=0 // pred_fallthru
    _
  // Predicated region
  $region14: #{tpu_custom_call.1} parent=0 // pred_check
    _
  $region15: #{tpu_custom_call.1} parent=0 // pred_check_branch
    %272 = sbr.rel (0) target = $region17
  $region16: #{tpu_custom_call.1} parent=0 // pred_region
    _
  $region17: #{tpu_custom_call.1} parent=0 // pred_fallthru
    _

</llo_original>
